<compile_context>
chip_gen: v6e
topology: v6e:2x2x1
jax: 0.10.0
libtpu: 0.0.40
codegen_flags: <defaults>
</compile_context>

<pallas_src>
import functools

import jax
import jax.numpy as jnp
from jax.experimental import pallas as pl
from jax.experimental.pallas import tpu as pltpu


def _pick_block(dim, preferred, align):
    """Largest block <= preferred that is either the full dim or an aligned divisor."""
    if dim <= preferred:
        return dim
    t = (preferred // align) * align
    while t >= align:
        if dim % t == 0:
            return t
        t -= align
    return dim  # fall back to a single full-dim block (always legal)


# ------------- Kernel 1: DoRA weight merge + column-wise L2 normalize -------------
def dora_merge_kernel(wT_ref, a_ref, b_ref, m_ref, nwT_ref, *, alpha):
    # wT_ref: (tk, out) tile of W.T ; a_ref: (tk, rank); b_ref: (rank, out); m_ref: (tk, 1)
    wt = wT_ref[...].astype(jnp.float32)
    lora = jnp.dot(
        a_ref[...].astype(jnp.float32),
        b_ref[...].astype(jnp.float32),
        preferred_element_type=jnp.float32,
    )                                                   # (tk, out)  MXU
    wt = wt + alpha * lora                              # numerator.T tile
    sumsq = jnp.sum(wt * wt, axis=-1, keepdims=True)    # (tk, 1) — row reduce == norm over out dim
    scale = m_ref[...].astype(jnp.float32) * jax.lax.rsqrt(sumsq)   # m / ||column||
    nwT_ref[...] = (wt * scale).astype(nwT_ref.dtype)   # new_weight.T tile


# ------------------- Kernel 2: y = x @ new_weight.T + bias -------------------
def dora_linear_kernel(x_ref, w_ref, bias_ref, o_ref, acc_ref):
    k = pl.program_id(2)

    @pl.when(k == 0)
    def _():
        acc_ref[...] = jnp.zeros_like(acc_ref)

    acc_ref[...] += jnp.dot(x_ref[...], w_ref[...], preferred_element_type=jnp.float32)

    @pl.when(k == pl.num_programs(2) - 1)
    def _():
        o_ref[...] = (acc_ref[...] + bias_ref[...].astype(jnp.float32)).astype(o_ref.dtype)


def dora_merged_linear(x, weight, bias, A, B, m, alpha, *,
                       block_m=256, block_n=512, block_k=512, block_k_merge=256):
    """Forward pass of LinearWithDoRAMerged.

    x: (batch, in_dim); weight: (out_dim, in_dim); bias: (out_dim,)
    A: (in_dim, rank);  B: (rank, out_dim);        m: (1, in_dim) or (in_dim,)
    """
    batch, in_dim = x.shape
    out_dim, in_dim_w = weight.shape
    rank = A.shape[1]
    assert in_dim_w == in_dim
    assert A.shape == (in_dim, rank)
    assert B.shape == (rank, out_dim)

    # Layout plumbing (outside the kernels): keep everything in W.T layout so the
    # out_dim axis is the lane-dense last axis for both kernels.
    wT = weight.T                                   # (in_dim, out_dim)
    m_col = jnp.reshape(m, (in_dim, 1))             # per-input-column magnitude
    bias_row = jnp.reshape(bias, (1, out_dim))

    # ---------------- Stage 1: merged + normalized weight (W.T layout) ----------------
    tkm = _pick_block(in_dim, block_k_merge, 8)
    new_wT = pl.pallas_call(
        functools.partial(dora_merge_kernel, alpha=float(alpha)),
        out_shape=jax.ShapeDtypeStruct((in_dim, out_dim), x.dtype),
        grid_spec=pltpu.PrefetchScalarGridSpec(
            num_scalar_prefetch=0,
            grid=(in_dim // tkm,),
            in_specs=[
                pl.BlockSpec((tkm, out_dim), lambda i: (i, 0)),
                pl.BlockSpec((tkm, rank), lambda i: (i, 0)),
                pl.BlockSpec((rank, out_dim), lambda i: (0, 0)),   # B stays VMEM-resident
                pl.BlockSpec((tkm, 1), lambda i: (i, 0)),
            ],
            out_specs=pl.BlockSpec((tkm, out_dim), lambda i: (i, 0)),
        ),
        compiler_params=pltpu.CompilerParams(dimension_semantics=("parallel",)),
    )(wT, A, B, m_col)

    # ---------------- Stage 2: tiled matmul with f32 accumulator ----------------
    tm = _pick_block(batch, block_m, 8)
    tn = _pick_block(out_dim, block_n, 128)
    tk = _pick_block(in_dim, block_k, 128)
    grid = (batch // tm, out_dim // tn, in_dim // tk)

    itemsize = jnp.dtype(x.dtype).itemsize
    cost = pl.CostEstimate(
        flops=2 * batch * in_dim * out_dim,
        transcendentals=0,
        bytes_accessed=itemsize * (batch * in_dim + in_dim * out_dim
                                   + batch * out_dim + out_dim),
    )

    return pl.pallas_call(
        dora_linear_kernel,
        out_shape=jax.ShapeDtypeStruct((batch, out_dim), x.dtype),
        grid_spec=pltpu.PrefetchScalarGridSpec(
            num_scalar_prefetch=0,
            grid=grid,
            in_specs=[
                pl.BlockSpec((tm, tk), lambda i, j, k: (i, k)),
                pl.BlockSpec((tk, tn), lambda i, j, k: (k, j)),
                pl.BlockSpec((1, tn), lambda i, j, k: (0, j)),
            ],
            out_specs=pl.BlockSpec((tm, tn), lambda i, j, k: (i, j)),
            scratch_shapes=[pltpu.VMEM((tm, tn), jnp.float32)],
        ),
        compiler_params=pltpu.CompilerParams(
            dimension_semantics=("parallel", "parallel", "arbitrary")),
        cost_estimate=cost,
    )(x, new_wT, bias_row)


if __name__ == "__main__":
    # Small deterministic example consistent with the module (Linear in=256, out=256).
    batch, in_dim, out_dim, rank = 4, 256, 256, 8
    alpha = 4.0

    key = jax.random.PRNGKey(0)
    kx, kw, kb, ka, kb2 = jax.random.split(key, 5)

    x = jax.random.normal(kx, (batch, in_dim), dtype=jnp.float32)
    W = jax.random.normal(kw, (out_dim, in_dim), dtype=jnp.float32) / jnp.sqrt(
        jnp.float32(in_dim))
    bias = jax.random.normal(kb, (out_dim,), dtype=jnp.float32)

    # LoRA params: PyTorch inits B = 0 (LoRA delta starts at zero); use a small
    # nonzero B here so the merged/normalized path is actually exercised.
    std_env = 1.0 / jnp.sqrt(jnp.float32(rank))
    A = jax.random.normal(ka, (in_dim, rank), dtype=jnp.float32) * std_env
    B = jax.random.normal(kb2, (rank, out_dim), dtype=jnp.float32) * 0.05

    # m init mirrors the module: ||W||_2 over dim=0, keepdim -> (1, in_dim)
    m = jnp.linalg.norm(W, axis=0, keepdims=True)

    # Small block sizes so this small example still exercises a multi-tile grid.
    out = dora_merged_linear(x, W, bias, A, B, m, alpha,
                             block_m=8, block_n=128, block_k=128, block_k_merge=128)
    out = jax.block_until_ready(out)

    # Plain-JAX reference of LinearWithDoRAMerged.forward
    lora_delta = A @ B                                    # (in, out)
    numerator = W + alpha * lora_delta.T                  # (out, in)
    denom = jnp.linalg.norm(numerator, axis=0, keepdims=True)
    new_w = m * (numerator / denom)
    ref = x @ new_w.T + bias

    assert out.shape == (batch, out_dim)
    assert jnp.allclose(out, ref, atol=5e-3, rtol=5e-3), float(
        jnp.max(jnp.abs(out - ref)))
    print("KERNEL_OK")
</pallas_src>

<mosaic_0001>
module attributes {stable_mosaic.version = 11 : i64} {
  func.func @dora_merge_kernel(%arg0: i32, %arg1: memref<128x256xf32, #tpu.memory_space<vmem>>, %arg2: memref<128x8xf32, #tpu.memory_space<vmem>>, %arg3: memref<8x256xf32, #tpu.memory_space<vmem>>, %arg4: memref<128x1xf32, #tpu.memory_space<vmem>>, %arg5: memref<128x256xf32, #tpu.memory_space<vmem>>) attributes {dimension_semantics = [#tpu.dimension_semantics<parallel>], iteration_bounds = array<i64: 2>, scalar_prefetch = 0 : i64, scratch_operands = 0 : i64, tpu.core_type = #tpu.core_type<tc>, window_params = [{transform_indices = @transform_0, window_bounds = array<i64: 128, 256>}, {transform_indices = @transform_1, window_bounds = array<i64: 128, 8>}, {pipeline_mode = #tpu.pipeline_mode<synchronous>, transform_indices = @transform_2, window_bounds = array<i64: 8, 256>}, {transform_indices = @transform_3, window_bounds = array<i64: 128, 1>}, {transform_indices = @transform_4, window_bounds = array<i64: 128, 256>}]} {
    %c0 = arith.constant 0 : index
    %c0_0 = arith.constant 0 : index
    %0 = vector.load %arg1[%c0, %c0_0] : memref<128x256xf32, #tpu.memory_space<vmem>>, vector<128x256xf32>
    %c0_1 = arith.constant 0 : index
    %c0_2 = arith.constant 0 : index
    %1 = vector.load %arg2[%c0_1, %c0_2] : memref<128x8xf32, #tpu.memory_space<vmem>>, vector<128x8xf32>
    %c0_3 = arith.constant 0 : index
    %c0_4 = arith.constant 0 : index
    %2 = vector.load %arg3[%c0_3, %c0_4] : memref<8x256xf32, #tpu.memory_space<vmem>>, vector<8x256xf32>
    %cst = arith.constant dense<0.000000e+00> : vector<128x256xf32>
    %3 = tpu.matmul %1, %2, %cst {dimension_numbers = #tpu.dot_dimension_numbers<[1], [0], [0], [1], [0, 0, 1, 1], [], []>} : vector<128x8xf32>, vector<8x256xf32>, vector<128x256xf32> -> vector<128x256xf32>
    %cst_5 = arith.constant 4.000000e+00 : f32
    %4 = vector.broadcast %cst_5 : f32 to vector<128x256xf32>
    %5 = arith.mulf %4, %3 : vector<128x256xf32>
    %6 = arith.addf %0, %5 : vector<128x256xf32>
    %7 = arith.mulf %6, %6 : vector<128x256xf32>
    %cst_6 = arith.constant dense<0.000000e+00> : vector<128xf32>
    %8 = vector.multi_reduction <add>, %7, %cst_6 [1] : vector<128x256xf32> to vector<128xf32>
    %9 = vector.shape_cast %8 : vector<128xf32> to vector<128x1xf32>
    %c0_7 = arith.constant 0 : index
    %c0_8 = arith.constant 0 : index
    %10 = vector.load %arg4[%c0_7, %c0_8] : memref<128x1xf32, #tpu.memory_space<vmem>>, vector<128x1xf32>
    %11 = math.rsqrt %9 : vector<128x1xf32>
    %12 = arith.mulf %10, %11 : vector<128x1xf32>
    %13 = vector.broadcast %12 : vector<128x1xf32> to vector<128x256xf32>
    %14 = arith.mulf %6, %13 : vector<128x256xf32>
    %c0_9 = arith.constant 0 : index
    %c0_10 = arith.constant 0 : index
    %15 = vector.load %arg5[%c0_9, %c0_10] : memref<128x256xf32, #tpu.memory_space<vmem>>, vector<128x256xf32>
    tpu.vector_store %arg5[%c0_9, %c0_10], %14 {strides = array<i32>} : memref<128x256xf32, #tpu.memory_space<vmem>>, vector<128x256xf32>,
    return
  }
  func.func @transform_0(%arg0: i32) -> (i32, i32) {
    %c0_i32 = arith.constant 0 : i32
    %c0_i32_0 = arith.constant 0 : i32
    return %arg0, %c0_i32 : i32, i32
  }
  func.func @transform_1(%arg0: i32) -> (i32, i32) {
    %c0_i32 = arith.constant 0 : i32
    %c0_i32_0 = arith.constant 0 : i32
    return %arg0, %c0_i32 : i32, i32
  }
  func.func @transform_2(%arg0: i32) -> (i32, i32) {
    %c0_i32 = arith.constant 0 : i32
    %c0_i32_0 = arith.constant 0 : i32
    %c0_i32_1 = arith.constant 0 : i32
    return %c0_i32, %c0_i32_0 : i32, i32
  }
  func.func @transform_3(%arg0: i32) -> (i32, i32) {
    %c0_i32 = arith.constant 0 : i32
    %c0_i32_0 = arith.constant 0 : i32
    return %arg0, %c0_i32 : i32, i32
  }
  func.func @transform_4(%arg0: i32) -> (i32, i32) {
    %c0_i32 = arith.constant 0 : i32
    %c0_i32_0 = arith.constant 0 : i32
    return %arg0, %c0_i32 : i32, i32
  }
}

</mosaic_0001>

<llo_original>
// kernel: tpu_custom_call.1
$region0: #{tpu_custom_call.1}
  #allocation0 [shape = 'u32[]', space=smem, size = 0x4, offset = 0x4, fixed_abs, tag = 'smem constant byte address 0x4 - core index']
  #allocation1 [shape = 'u32[144,128]{1,0:T(1,128)}', space=vmem, size = 0x12000, scoped, tag = 'internal scratch']
  %s0 = inlined_call_operand.vmem [shape: f32[256,256], index: 0, kind: input, shape index: {}]
  %s1 = inlined_call_operand.vmem [shape: f32[256,8], index: 1, kind: input, shape index: {}]
  %s2 = inlined_call_operand.vmem [shape: f32[8,256], index: 2, kind: input, shape index: {}]
  %s3 = inlined_call_operand.vmem [shape: f32[256,1], index: 3, kind: input, shape index: {}]
  %s4 = inlined_call_operand.hbm [shape: f32[256,256], index: 4, kind: output, shape index: {}]
  %s5 = sld [smem:[#allocation0]]
  $region49: #{tpu_custom_call.1} parent=0
    _
  %s7 = ssub.s32 1, %s5
  %s8 = scalar_select 0, %s7, %s5
  $region1: #{tpu_custom_call.1} parent=0
    #allocation2 [shape = 'u8[262144]{0}', space=vmem, size = 0x40000, scoped, tag = 'output window, operand 0']
    #allocation3 [shape = 's32[2]{0}', space=sflag, size = 0x8, scoped, tag = 'scoped memory for tpu_custom_call.1']
    %9 = vsyncpa [#allocation3], 0
    %s10 = scalar_lea.sflag [#allocation3], 1
    %11 = vsyncpa %s10, 0
    loop: start=0, step=1, limit=4
    $region2: #{tpu_custom_call.1} parent=1 // loop_pre_header
      _
    $region3: #{tpu_custom_call.1} parent=1 // loop_header
      %s13 = sphi 0, %s17
      %p14 = scmp.ge.s32.totalorder %s13, 4
      %s23 = sphi 0, %s25
      %s26 = sphi 0, %s23
      %s27 = sphi 0, %s26
      %s43 = sphi 0, %s27
      %s49 = sphi 0, %s51
      %s52 = sphi 0, %s49
      %s53 = sphi 0, %s52
      %s69 = sphi 0, %s53
      %s73 = sphi 0, %s73
      %s75 = sphi 0, %s73
      %s76 = sphi 0, %s75
      %s90 = sphi 0, %s76
      %s96 = sphi 0, %s98
      %s99 = sphi 0, %s96
      %s100 = sphi 0, %s99
      %s116 = sphi 0, %s100
      %s122 = sphi 0, %s124
      %s125 = sphi 0, %s122
      %s126 = sphi 0, %s125
      %s142 = sphi 0, %s126
    $region4: #{tpu_custom_call.1} parent=1 // loop_header_branch
      %16 = sbr.rel (%p14) target = $region8
    $region5: #{tpu_custom_call.1} parent=1 // loop_body
      %s18 = ssub.s32 %s13, 1
      %s19 = ssub.s32 %s13, 2
      %s20 = sadd.s32 %s13, 1
      %s21 = ssub.s32 %s13, %s20
      %p22 = scmp.eq.s32.totalorder %s21, 0
      %s24 = sadd.s32 %s23, 1
      %s25 = scalar_select %p22, %s23, %s24
      %p28 = pneg %p22
      %p29 = scmp.eq.s32.totalorder %s13, 1
      %p30 = por %p28, %p29
      %p31 = scmp.ne.s32.totalorder %s23, %s26
      %p32 = scmp.eq.s32.totalorder %s13, 0
      %p33 = por %p31, %p32
      %p34 = scmp.ne.s32.totalorder %s23, %s26
      %p35 = scmp.eq.s32.totalorder %s18, 1
      %p36 = por %p34, %p35
      %p37 = scmp.ne.s32.totalorder %s26, %s27
      %p38 = scmp.eq.s32.totalorder %s18, 0
      %p39 = por %p37, %p38
      %p40 = scmp.ne.s32.totalorder %s26, %s27
      %p41 = scmp.eq.s32.totalorder %s19, 1
      %p42 = por %p40, %p41
      %p44 = scmp.ne.s32.totalorder %s27, %s43
      %p45 = scmp.eq.s32.totalorder %s19, 0
      %p46 = por %p44, %p45
      %s47 = ssub.s32 %s13, %s20
      %p48 = scmp.eq.s32.totalorder %s47, 0
      %s50 = sadd.s32 %s49, 1
      %s51 = scalar_select %p48, %s49, %s50
      %p54 = pneg %p48
      %p55 = scmp.eq.s32.totalorder %s13, 1
      %p56 = por %p54, %p55
      %p57 = scmp.ne.s32.totalorder %s49, %s52
      %p58 = scmp.eq.s32.totalorder %s13, 0
      %p59 = por %p57, %p58
      %p60 = scmp.ne.s32.totalorder %s49, %s52
      %p61 = scmp.eq.s32.totalorder %s18, 1
      %p62 = por %p60, %p61
      %p63 = scmp.ne.s32.totalorder %s52, %s53
      %p64 = scmp.eq.s32.totalorder %s18, 0
      %p65 = por %p63, %p64
      %p66 = scmp.ne.s32.totalorder %s52, %s53
      %p67 = scmp.eq.s32.totalorder %s19, 1
      %p68 = por %p66, %p67
      %p70 = scmp.ne.s32.totalorder %s53, %s69
      %p71 = scmp.eq.s32.totalorder %s19, 0
      %p72 = por %p70, %p71
      %s74 = sadd.s32 %s73, 1
      %p77 = scmp.eq.s32.totalorder %s13, 1
      %p78 = scmp.ne.s32.totalorder %s73, %s75
      %p79 = scmp.eq.s32.totalorder %s13, 0
      %p80 = por %p78, %p79
      %p81 = scmp.ne.s32.totalorder %s73, %s75
      %p82 = scmp.eq.s32.totalorder %s18, 1
      %p83 = por %p81, %p82
      %p84 = scmp.ne.s32.totalorder %s75, %s76
      %p85 = scmp.eq.s32.totalorder %s18, 0
      %p86 = por %p84, %p85
      %p87 = scmp.ne.s32.totalorder %s75, %s76
      %p88 = scmp.eq.s32.totalorder %s19, 1
      %p89 = por %p87, %p88
      %p91 = scmp.ne.s32.totalorder %s76, %s90
      %p92 = scmp.eq.s32.totalorder %s19, 0
      %p93 = por %p91, %p92
      %s94 = ssub.s32 %s13, %s20
      %p95 = scmp.eq.s32.totalorder %s94, 0
      %s97 = sadd.s32 %s96, 1
      %s98 = scalar_select %p95, %s96, %s97
      %p101 = pneg %p95
      %p102 = scmp.eq.s32.totalorder %s13, 1
      %p103 = por %p101, %p102
      %p104 = scmp.ne.s32.totalorder %s96, %s99
      %p105 = scmp.eq.s32.totalorder %s13, 0
      %p106 = por %p104, %p105
      %p107 = scmp.ne.s32.totalorder %s96, %s99
      %p108 = scmp.eq.s32.totalorder %s18, 1
      %p109 = por %p107, %p108
      %p110 = scmp.ne.s32.totalorder %s99, %s100
      %p111 = scmp.eq.s32.totalorder %s18, 0
      %p112 = por %p110, %p111
      %p113 = scmp.ne.s32.totalorder %s99, %s100
      %p114 = scmp.eq.s32.totalorder %s19, 1
      %p115 = por %p113, %p114
      %p117 = scmp.ne.s32.totalorder %s100, %s116
      %p118 = scmp.eq.s32.totalorder %s19, 0
      %p119 = por %p117, %p118
      %s120 = ssub.s32 %s13, %s20
      %p121 = scmp.eq.s32.totalorder %s120, 0
      %s123 = sadd.s32 %s122, 1
      %s124 = scalar_select %p121, %s122, %s123
      %p127 = pneg %p121
      %p128 = scmp.eq.s32.totalorder %s13, 1
      %p129 = por %p127, %p128
      %p130 = scmp.ne.s32.totalorder %s122, %s125
      %p131 = scmp.eq.s32.totalorder %s13, 0
      %p132 = por %p130, %p131
      %p133 = scmp.ne.s32.totalorder %s122, %s125
      %p134 = scmp.eq.s32.totalorder %s18, 1
      %p135 = por %p133, %p134
      %p136 = scmp.ne.s32.totalorder %s125, %s126
      %p137 = scmp.eq.s32.totalorder %s18, 0
      %p138 = por %p136, %p137
      %p139 = scmp.ne.s32.totalorder %s125, %s126
      %p140 = scmp.eq.s32.totalorder %s19, 1
      %p141 = por %p139, %p140
      %p143 = scmp.ne.s32.totalorder %s126, %s142
      %p144 = scmp.eq.s32.totalorder %s19, 0
      %p145 = por %p143, %p144
      %p146 = scmp.le.s32.totalorder 1, %s13
      %p147 = scmp.lt.s32.totalorder %s13, 3
      %p148 = pnand %p146, %p147
      %p149 = pneg %p148
      // Predicated region
      $region9: #{tpu_custom_call.1} parent=5 // pred_check
        _
      $region10: #{tpu_custom_call.1} parent=5 // pred_check_branch
        %151 = sbr.rel (%p148) target = $region12
      $region11: #{tpu_custom_call.1} parent=5 // pred_region
        %s152 = ssub.s32 %s13, 1
        // Predicated region
        $region13: #{tpu_custom_call.1} parent=11 // pred_check
          %p153 = pneg %p86
        $region14: #{tpu_custom_call.1} parent=11 // pred_check_branch
          %155 = sbr.rel (%p153) target = $region16
        $region15: #{tpu_custom_call.1} parent=11 // pred_region
          _
        $region16: #{tpu_custom_call.1} parent=11 // pred_fallthru
          _
      $region12: #{tpu_custom_call.1} parent=5 // pred_fallthru
        _
      %p156 = scmp.lt.s32.totalorder %s13, 2
      // Predicated region
      $region17: #{tpu_custom_call.1} parent=5 // pred_check
        %p157 = pneg %p156
      $region18: #{tpu_custom_call.1} parent=5 // pred_check_branch
        %159 = sbr.rel (%p157) target = $region20
      $region19: #{tpu_custom_call.1} parent=5 // pred_region
        // Predicated region
        $region21: #{tpu_custom_call.1} parent=19 // pred_check
          %p160 = pneg %p33
        $region22: #{tpu_custom_call.1} parent=19 // pred_check_branch
          %162 = sbr.rel (%p160) target = $region24
        $region23: #{tpu_custom_call.1} parent=19 // pred_region
          %s163 = smul.u32 16, %s13
          %p164 = scmp.lt.s32.totalorder %s163, 31
          %s165 = scalar_select %p164, %s163, 31
          %s166 = smul.addr %s165, 2
          %s167 = smul.addr %s166, 8
          %s168 = scalar_lea.vmem %s0, %s167
          %s169 = smul.u32 16, %s13
        $region24: #{tpu_custom_call.1} parent=19 // pred_fallthru
          _
        // Predicated region
        $region25: #{tpu_custom_call.1} parent=19 // pred_check
          %p170 = pneg %p59
        $region26: #{tpu_custom_call.1} parent=19 // pred_check_branch
          %172 = sbr.rel (%p170) target = $region28
        $region27: #{tpu_custom_call.1} parent=19 // pred_region
          %s173 = smul.u32 16, %s13
          %p174 = scmp.lt.s32.totalorder %s173, 31
          %s175 = scalar_select %p174, %s173, 31
          %s176 = smul.addr %s175, 8
          %s177 = scalar_lea.vmem %s1, %s176
          %s178 = smul.u32 16, %s13
        $region28: #{tpu_custom_call.1} parent=19 // pred_fallthru
          _
        // Predicated region
        $region29: #{tpu_custom_call.1} parent=19 // pred_check
          %p179 = pneg %p106
        $region30: #{tpu_custom_call.1} parent=19 // pred_check_branch
          %181 = sbr.rel (%p179) target = $region32
        $region31: #{tpu_custom_call.1} parent=19 // pred_region
          %s182 = smul.u32 16, %s13
          %p183 = scmp.lt.s32.totalorder %s182, 31
          %s184 = scalar_select %p183, %s182, 31
          %s185 = smul.addr %s184, 8
          %s186 = scalar_lea.vmem %s3, %s185
          %s187 = smul.u32 16, %s13
        $region32: #{tpu_custom_call.1} parent=19 // pred_fallthru
          _
      $region20: #{tpu_custom_call.1} parent=5 // pred_fallthru
        _
      %p188 = scmp.le.s32.totalorder 1, %s13
      %p189 = scmp.lt.s32.totalorder %s13, 3
      %p190 = pnand %p188, %p189
      %p191 = pneg %p190
      // Predicated region
      $region33: #{tpu_custom_call.1} parent=5 // pred_check
        _
      $region34: #{tpu_custom_call.1} parent=5 // pred_check_branch
        %193 = sbr.rel (%p190) target = $region36
      $region35: #{tpu_custom_call.1} parent=5 // pred_region
        %s194 = ssub.s32 %s13, 1
        %s195 = smul.u32 16, %s18
        %p196 = scmp.lt.s32.totalorder %s195, 31
        %s197 = scalar_select %p196, %s195, 31
        %s198 = smul.addr %s197, 2
        %s199 = smul.addr %s198, 8
        %s200 = scalar_lea.vmem %s0, %s199
        %p201 = pneg %p39
        %p202 = pneg %p36
        %s203 = smul.u32 16, %s18
        %p204 = scmp.lt.s32.totalorder %s203, 31
        %s205 = scalar_select %p204, %s203, 31
        %s206 = smul.addr %s205, 8
        %s207 = scalar_lea.vmem %s1, %s206
        %p208 = pneg %p65
        %p209 = pneg %p62
        %p210 = pneg %p86
        %p211 = pneg %p83
        %s212 = smul.u32 16, %s18
        %p213 = scmp.lt.s32.totalorder %s212, 31
        %s214 = scalar_select %p213, %s212, 31
        %s215 = smul.addr %s214, 8
        %s216 = scalar_lea.vmem %s3, %s215
        %p217 = pneg %p112
        %p218 = pneg %p109
        %p219 = pneg %p138
        %p220 = pneg %p135
        %s221 = sand.u32 %s125, 1
        %s222 = scalar_lea.sflag [#allocation3], %s221
        %s223 = sand.u32 %s125, 1
        %s224 = smul.addr %s223, 256
        %s225 = scalar_lea.vmem [#allocation2], %s224
        %s226 = smul.u32 16, %s18
        %p227 = scmp.lt.s32.totalorder %s226, 31
        %s228 = scalar_select %p227, %s226, 31
        %s229 = smul.addr %s228, 2
        %s230 = smul.addr %s229, 8
        %s231 = scalar_lea.vmem %s0, %s230
        %s232 = smul.u32 16, %s18
        %s233 = smul.u32 16, %s18
        %p234 = scmp.lt.s32.totalorder %s233, 31
        %s235 = scalar_select %p234, %s233, 31
        %s236 = smul.addr %s235, 8
        %s237 = scalar_lea.vmem %s1, %s236
        %s238 = smul.u32 16, %s18
        %s239 = smul.u32 16, %s18
        %p240 = scmp.lt.s32.totalorder %s239, 31
        %s241 = scalar_select %p240, %s239, 31
        %s242 = smul.addr %s241, 8
        %s243 = scalar_lea.vmem %s3, %s242
        %s244 = smul.u32 16, %s18
        %s245 = smul.u32 16, %s18
        %v246 = vld [vmem:[%s231] sm:$0xff]
        %v247 = vld [vmem:[%s231 + $0x8] sm:$0xff]
        %v248 = vld [vmem:[%s231 + $0x10] sm:$0xff]
        %v249 = vld [vmem:[%s231 + $0x18] sm:$0xff]
        %v250 = vld [vmem:[%s231 + $0x20] sm:$0xff]
        %v251 = vld [vmem:[%s231 + $0x28] sm:$0xff]
        %v252 = vld [vmem:[%s231 + $0x30] sm:$0xff]
        %v253 = vld [vmem:[%s231 + $0x38] sm:$0xff]
        %v254 = vld [vmem:[%s231 + $0x40] sm:$0xff]
        %v255 = vld [vmem:[%s231 + $0x48] sm:$0xff]
        %v256 = vld [vmem:[%s231 + $0x50] sm:$0xff]
        %v257 = vld [vmem:[%s231 + $0x58] sm:$0xff]
        %v258 = vld [vmem:[%s231 + $0x60] sm:$0xff]
        %v259 = vld [vmem:[%s231 + $0x68] sm:$0xff]
        %v260 = vld [vmem:[%s231 + $0x70] sm:$0xff]
        %v261 = vld [vmem:[%s231 + $0x78] sm:$0xff]
        %v262 = vld [vmem:[%s231 + $0x80] sm:$0xff]
        %v263 = vld [vmem:[%s231 + $0x88] sm:$0xff]
        %v264 = vld [vmem:[%s231 + $0x90] sm:$0xff]
        %v265 = vld [vmem:[%s231 + $0x98] sm:$0xff]
        %v266 = vld [vmem:[%s231 + $0xa0] sm:$0xff]
        %v267 = vld [vmem:[%s231 + $0xa8] sm:$0xff]
        %v268 = vld [vmem:[%s231 + $0xb0] sm:$0xff]
        %v269 = vld [vmem:[%s231 + $0xb8] sm:$0xff]
        %v270 = vld [vmem:[%s231 + $0xc0] sm:$0xff]
        %v271 = vld [vmem:[%s231 + $0xc8] sm:$0xff]
        %v272 = vld [vmem:[%s231 + $0xd0] sm:$0xff]
        %v273 = vld [vmem:[%s231 + $0xd8] sm:$0xff]
        %v274 = vld [vmem:[%s231 + $0xe0] sm:$0xff]
        %v275 = vld [vmem:[%s231 + $0xe8] sm:$0xff]
        %v276 = vld [vmem:[%s231 + $0xf0] sm:$0xff]
        %v277 = vld [vmem:[%s231 + $0xf8] sm:$0xff]
        %v278 = vld [vmem:[%s237] sm:$0xff]
        %v279 = vld [vmem:[%s237 + $0x8] sm:$0xff]
        %v280 = vld [vmem:[%s237 + $0x10] sm:$0xff]
        %v281 = vld [vmem:[%s237 + $0x18] sm:$0xff]
        %v282 = vld [vmem:[%s237 + $0x20] sm:$0xff]
        %v283 = vld [vmem:[%s237 + $0x28] sm:$0xff]
        %v284 = vld [vmem:[%s237 + $0x30] sm:$0xff]
        %v285 = vld [vmem:[%s237 + $0x38] sm:$0xff]
        %v286 = vld [vmem:[%s237 + $0x40] sm:$0xff]
        %v287 = vld [vmem:[%s237 + $0x48] sm:$0xff]
        %v288 = vld [vmem:[%s237 + $0x50] sm:$0xff]
        %v289 = vld [vmem:[%s237 + $0x58] sm:$0xff]
        %v290 = vld [vmem:[%s237 + $0x60] sm:$0xff]
        %v291 = vld [vmem:[%s237 + $0x68] sm:$0xff]
        %v292 = vld [vmem:[%s237 + $0x70] sm:$0xff]
        %v293 = vld [vmem:[%s237 + $0x78] sm:$0xff]
        %v294 = vld [vmem:[%s2] sm:$0xff]
        %v295 = vld [vmem:[%s2 + $0x8] sm:$0xff]
        %vm296 = vcmask 64512
        %v298 = vsel %vm296, %v278, 0
        %v301 = vsel %vm296, %v279, 0
        %v304 = vsel %vm296, %v280, 0
        %v307 = vsel %vm296, %v281, 0
        %v310 = vsel %vm296, %v282, 0
        %v313 = vsel %vm296, %v283, 0
        %v316 = vsel %vm296, %v284, 0
        %v319 = vsel %vm296, %v285, 0
        %v322 = vsel %vm296, %v286, 0
        %v325 = vsel %vm296, %v287, 0
        %v328 = vsel %vm296, %v288, 0
        %v331 = vsel %vm296, %v289, 0
        %v334 = vsel %vm296, %v290, 0
        %v337 = vsel %vm296, %v291, 0
        %v340 = vsel %vm296, %v292, 0
        %v343 = vsel %vm296, %v293, 0
        %345 = vmatprep.subr.mxu0 0.0
        %346 = vmatpush1.msra.mxu0 0.0
        %347 = vmatprep.subr.mxu0 0.0
        %348 = vmatpush1.msra.mxu0 0.0
        %349 = vmatprep.subr.mxu0 0.0
        %350 = vmatpush1.msra.mxu0 0.0
        %351 = vmatprep.subr.mxu0 0.0
        %352 = vmatpush1.msra.mxu0 0.0
        %353 = vmatprep.subr.mxu0 0.0
        %354 = vmatpush1.msra.mxu0 0.0
        %355 = vmatprep.subr.mxu0 0.0
        %356 = vmatpush1.msra.mxu0 0.0
        %357 = vmatprep.subr.mxu0 0.0
        %358 = vmatpush1.msra.mxu0 0.0
        %359 = vmatprep.subr.mxu0 0.0
        %360 = vmatpush1.msra.mxu0 0.0
        %361 = vmatprep.subr.mxu0 0.0
        %362 = vmatpush1.msra.mxu0 0.0
        %363 = vmatprep.subr.mxu0 0.0
        %364 = vmatpush1.msra.mxu0 0.0
        %365 = vmatprep.subr.mxu0 0.0
        %366 = vmatpush1.msra.mxu0 0.0
        %367 = vmatprep.subr.mxu0 0.0
        %368 = vmatpush1.msra.mxu0 0.0
        %369 = vmatprep.subr.mxu0 0.0
        %370 = vmatpush1.msra.mxu0 0.0
        %371 = vmatprep.subr.mxu0 0.0
        %372 = vmatpush1.msra.mxu0 0.0
        %373 = vmatprep.subr.mxu0 0.0
        %374 = vmatpush1.msra.mxu0 0.0
        %375 = vmatprep.subr.mxu0 %v295
        %376 = vmatpush1.msra.mxu0 %v294
        %377 = vmatprep.subr.mxu0 0.0
        %378 = vmatpush2.msra.mxu0 0.0
        %379 = vmatprep.subr.mxu0 0.0
        %380 = vmatpush2.msra.mxu0 0.0
        %381 = vmatprep.subr.mxu0 0.0
        %382 = vmatpush2.msra.mxu0 0.0
        %383 = vmatprep.subr.mxu0 0.0
        %384 = vmatpush2.msra.mxu0 0.0
        %385 = vmatprep.subr.mxu0 0.0
        %386 = vmatpush2.msra.mxu0 0.0
        %387 = vmatprep.subr.mxu0 0.0
        %388 = vmatpush2.msra.mxu0 0.0
        %389 = vmatprep.subr.mxu0 0.0
        %390 = vmatpush2.msra.mxu0 0.0
        %391 = vmatprep.subr.mxu0 0.0
        %392 = vmatpush2.msra.mxu0 0.0
        %393 = vmatprep.subr.mxu0 0.0
        %394 = vmatpush2.msra.mxu0 0.0
        %395 = vmatprep.subr.mxu0 0.0
        %396 = vmatpush2.msra.mxu0 0.0
        %397 = vmatprep.subr.mxu0 0.0
        %398 = vmatpush2.msra.mxu0 0.0
        %399 = vmatprep.subr.mxu0 0.0
        %400 = vmatpush2.msra.mxu0 0.0
        %401 = vmatprep.subr.mxu0 0.0
        %402 = vmatpush2.msra.mxu0 0.0
        %403 = vmatprep.subr.mxu0 0.0
        %404 = vmatpush2.msra.mxu0 0.0
        %405 = vmatprep.subr.mxu0 0.0
        %406 = vmatpush2.msra.mxu0 0.0
        %407 = vmatprep.subr.mxu0 0.0
        %408 = vmatpush2.msra.mxu0 0.0
        %409 = vmatprep.mubr.f32.mxu0 0.0
        %410 = vmatmul.mubr.f32.gmra.mxu0 %v298
        %v411 = vpop.f32.mrf.mxu0
        %v412 = vadd.f32 0.0, %v411
        %v413 = vpop.f32.mrf.mxu0
        %v414 = vadd.f32 0.0, %v413
        %415 = vmatprep.mubr.f32.mxu0 0.0
        %416 = vmatmul.mubr.f32.gmra.mxu0 %v301
        %v417 = vpop.f32.mrf.mxu0
        %v418 = vadd.f32 0.0, %v417
        %v419 = vpop.f32.mrf.mxu0
        %v420 = vadd.f32 0.0, %v419
        %421 = vmatprep.mubr.f32.mxu0 0.0
        %422 = vmatmul.mubr.f32.gmra.mxu0 %v304
        %v423 = vpop.f32.mrf.mxu0
        %v424 = vadd.f32 0.0, %v423
        %v425 = vpop.f32.mrf.mxu0
        %v426 = vadd.f32 0.0, %v425
        %427 = vmatprep.mubr.f32.mxu0 0.0
        %428 = vmatmul.mubr.f32.gmra.mxu0 %v307
        %v429 = vpop.f32.mrf.mxu0
        %v430 = vadd.f32 0.0, %v429
        %v431 = vpop.f32.mrf.mxu0
        %v432 = vadd.f32 0.0, %v431
        %433 = vmatprep.mubr.f32.mxu0 0.0
        %434 = vmatmul.mubr.f32.gmra.mxu0 %v310
        %v435 = vpop.f32.mrf.mxu0
        %v436 = vadd.f32 0.0, %v435
        %v437 = vpop.f32.mrf.mxu0
        %v438 = vadd.f32 0.0, %v437
        %439 = vmatprep.mubr.f32.mxu0 0.0
        %440 = vmatmul.mubr.f32.gmra.mxu0 %v313
        %v441 = vpop.f32.mrf.mxu0
        %v442 = vadd.f32 0.0, %v441
        %v443 = vpop.f32.mrf.mxu0
        %v444 = vadd.f32 0.0, %v443
        %445 = vmatprep.mubr.f32.mxu0 0.0
        %446 = vmatmul.mubr.f32.gmra.mxu0 %v316
        %v447 = vpop.f32.mrf.mxu0
        %v448 = vadd.f32 0.0, %v447
        %v449 = vpop.f32.mrf.mxu0
        %v450 = vadd.f32 0.0, %v449
        %451 = vmatprep.mubr.f32.mxu0 0.0
        %452 = vmatmul.mubr.f32.gmra.mxu0 %v319
        %v453 = vpop.f32.mrf.mxu0
        %v454 = vadd.f32 0.0, %v453
        %v455 = vpop.f32.mrf.mxu0
        %v456 = vadd.f32 0.0, %v455
        %457 = vmatprep.mubr.f32.mxu0 0.0
        %458 = vmatmul.mubr.f32.gmra.mxu0 %v322
        %v459 = vpop.f32.mrf.mxu0
        %v460 = vadd.f32 0.0, %v459
        %v461 = vpop.f32.mrf.mxu0
        %v462 = vadd.f32 0.0, %v461
        %463 = vmatprep.mubr.f32.mxu0 0.0
        %464 = vmatmul.mubr.f32.gmra.mxu0 %v325
        %v465 = vpop.f32.mrf.mxu0
        %v466 = vadd.f32 0.0, %v465
        %v467 = vpop.f32.mrf.mxu0
        %v468 = vadd.f32 0.0, %v467
        %469 = vmatprep.mubr.f32.mxu0 0.0
        %470 = vmatmul.mubr.f32.gmra.mxu0 %v328
        %v471 = vpop.f32.mrf.mxu0
        %v472 = vadd.f32 0.0, %v471
        %v473 = vpop.f32.mrf.mxu0
        %v474 = vadd.f32 0.0, %v473
        %475 = vmatprep.mubr.f32.mxu0 0.0
        %476 = vmatmul.mubr.f32.gmra.mxu0 %v331
        %v477 = vpop.f32.mrf.mxu0
        %v478 = vadd.f32 0.0, %v477
        %v479 = vpop.f32.mrf.mxu0
        %v480 = vadd.f32 0.0, %v479
        %481 = vmatprep.mubr.f32.mxu0 0.0
        %482 = vmatmul.mubr.f32.gmra.mxu0 %v334
        %v483 = vpop.f32.mrf.mxu0
        %v484 = vadd.f32 0.0, %v483
        %v485 = vpop.f32.mrf.mxu0
        %v486 = vadd.f32 0.0, %v485
        %487 = vmatprep.mubr.f32.mxu0 0.0
        %488 = vmatmul.mubr.f32.gmra.mxu0 %v337
        %v489 = vpop.f32.mrf.mxu0
        %v490 = vadd.f32 0.0, %v489
        %v491 = vpop.f32.mrf.mxu0
        %v492 = vadd.f32 0.0, %v491
        %493 = vmatprep.mubr.f32.mxu0 0.0
        %494 = vmatmul.mubr.f32.gmra.mxu0 %v340
        %v495 = vpop.f32.mrf.mxu0
        %v496 = vadd.f32 0.0, %v495
        %v497 = vpop.f32.mrf.mxu0
        %v498 = vadd.f32 0.0, %v497
        %499 = vmatprep.mubr.f32.mxu0 0.0
        %500 = vmatmul.mubr.f32.gmra.mxu0 %v343
        %v501 = vpop.f32.mrf.mxu0
        %v502 = vadd.f32 0.0, %v501
        %v503 = vpop.f32.mrf.mxu0
        %v504 = vadd.f32 0.0, %v503
        %505 = vdwg.mxu0
        %v506 = vmul.f32 %v412, 4.0
        %v507 = vmul.f32 %v414, 4.0
        %v508 = vmul.f32 %v418, 4.0
        %v509 = vmul.f32 %v420, 4.0
        %v510 = vmul.f32 %v424, 4.0
        %v511 = vmul.f32 %v426, 4.0
        %v512 = vmul.f32 %v430, 4.0
        %v513 = vmul.f32 %v432, 4.0
        %v514 = vmul.f32 %v436, 4.0
        %v515 = vmul.f32 %v438, 4.0
        %v516 = vmul.f32 %v442, 4.0
        %v517 = vmul.f32 %v444, 4.0
        %v518 = vmul.f32 %v448, 4.0
        %v519 = vmul.f32 %v450, 4.0
        %v520 = vmul.f32 %v454, 4.0
        %v521 = vmul.f32 %v456, 4.0
        %v522 = vmul.f32 %v460, 4.0
        %v523 = vmul.f32 %v462, 4.0
        %v524 = vmul.f32 %v466, 4.0
        %v525 = vmul.f32 %v468, 4.0
        %v526 = vmul.f32 %v472, 4.0
        %v527 = vmul.f32 %v474, 4.0
        %v528 = vmul.f32 %v478, 4.0
        %v529 = vmul.f32 %v480, 4.0
        %v530 = vmul.f32 %v484, 4.0
        %v531 = vmul.f32 %v486, 4.0
        %v532 = vmul.f32 %v490, 4.0
        %v533 = vmul.f32 %v492, 4.0
        %v534 = vmul.f32 %v496, 4.0
        %v535 = vmul.f32 %v498, 4.0
        %v536 = vmul.f32 %v502, 4.0
        %v537 = vmul.f32 %v504, 4.0
        %v538 = vadd.f32 %v246, %v506
        %v539 = vadd.f32 %v247, %v507
        %v540 = vadd.f32 %v248, %v508
        %v541 = vadd.f32 %v249, %v509
        %v542 = vadd.f32 %v250, %v510
        %v543 = vadd.f32 %v251, %v511
        %v544 = vadd.f32 %v252, %v512
        %v545 = vadd.f32 %v253, %v513
        %v546 = vadd.f32 %v254, %v514
        %v547 = vadd.f32 %v255, %v515
        %v548 = vadd.f32 %v256, %v516
        %v549 = vadd.f32 %v257, %v517
        %v550 = vadd.f32 %v258, %v518
        %v551 = vadd.f32 %v259, %v519
        %v552 = vadd.f32 %v260, %v520
        %v553 = vadd.f32 %v261, %v521
        %v554 = vadd.f32 %v262, %v522
        %v555 = vadd.f32 %v263, %v523
        %v556 = vadd.f32 %v264, %v524
        %v557 = vadd.f32 %v265, %v525
        %v558 = vadd.f32 %v266, %v526
        %v559 = vadd.f32 %v267, %v527
        %v560 = vadd.f32 %v268, %v528
        %v561 = vadd.f32 %v269, %v529
        %v562 = vadd.f32 %v270, %v530
        %v563 = vadd.f32 %v271, %v531
        %v564 = vadd.f32 %v272, %v532
        %v565 = vadd.f32 %v273, %v533
        %v566 = vadd.f32 %v274, %v534
        %v567 = vadd.f32 %v275, %v535
        %v568 = vadd.f32 %v276, %v536
        %v569 = vadd.f32 %v277, %v537
        %v570 = vmul.f32 %v538, %v538
        %v571 = vmul.f32 %v539, %v539
        %v572 = vmul.f32 %v540, %v540
        %v573 = vmul.f32 %v541, %v541
        %v574 = vmul.f32 %v542, %v542
        %v575 = vmul.f32 %v543, %v543
        %v576 = vmul.f32 %v544, %v544
        %v577 = vmul.f32 %v545, %v545
        %v578 = vmul.f32 %v546, %v546
        %v579 = vmul.f32 %v547, %v547
        %v580 = vmul.f32 %v548, %v548
        %v581 = vmul.f32 %v549, %v549
        %v582 = vmul.f32 %v550, %v550
        %v583 = vmul.f32 %v551, %v551
        %v584 = vmul.f32 %v552, %v552
        %v585 = vmul.f32 %v553, %v553
        %v586 = vmul.f32 %v554, %v554
        %v587 = vmul.f32 %v555, %v555
        %v588 = vmul.f32 %v556, %v556
        %v589 = vmul.f32 %v557, %v557
        %v590 = vmul.f32 %v558, %v558
        %v591 = vmul.f32 %v559, %v559
        %v592 = vmul.f32 %v560, %v560
        %v593 = vmul.f32 %v561, %v561
        %v594 = vmul.f32 %v562, %v562
        %v595 = vmul.f32 %v563, %v563
        %v596 = vmul.f32 %v564, %v564
        %v597 = vmul.f32 %v565, %v565
        %v598 = vmul.f32 %v566, %v566
        %v599 = vmul.f32 %v567, %v567
        %v600 = vmul.f32 %v568, %v568
        %v601 = vmul.f32 %v569, %v569
        %v602 = vadd.f32 %v570, %v571
        %603 = vadd.xlane.f32.xlu0 %v602
        %v604 = vpop.xlane.xlu0 %603
        %v605 = vadd.f32 %v572, %v573
        %606 = vadd.xlane.f32.xlu0 %v605
        %v607 = vpop.xlane.xlu0 %606
        %v608 = vadd.f32 %v574, %v575
        %609 = vadd.xlane.f32.xlu0 %v608
        %v610 = vpop.xlane.xlu0 %609
        %v611 = vadd.f32 %v576, %v577
        %612 = vadd.xlane.f32.xlu0 %v611
        %v613 = vpop.xlane.xlu0 %612
        %v614 = vadd.f32 %v578, %v579
        %615 = vadd.xlane.f32.xlu0 %v614
        %v616 = vpop.xlane.xlu0 %615
        %v617 = vadd.f32 %v580, %v581
        %618 = vadd.xlane.f32.xlu0 %v617
        %v619 = vpop.xlane.xlu0 %618
        %v620 = vadd.f32 %v582, %v583
        %621 = vadd.xlane.f32.xlu0 %v620
        %v622 = vpop.xlane.xlu0 %621
        %v623 = vadd.f32 %v584, %v585
        %624 = vadd.xlane.f32.xlu0 %v623
        %v625 = vpop.xlane.xlu0 %624
        %v626 = vadd.f32 %v586, %v587
        %627 = vadd.xlane.f32.xlu0 %v626
        %v628 = vpop.xlane.xlu0 %627
        %v629 = vadd.f32 %v588, %v589
        %630 = vadd.xlane.f32.xlu0 %v629
        %v631 = vpop.xlane.xlu0 %630
        %v632 = vadd.f32 %v590, %v591
        %633 = vadd.xlane.f32.xlu0 %v632
        %v634 = vpop.xlane.xlu0 %633
        %v635 = vadd.f32 %v592, %v593
        %636 = vadd.xlane.f32.xlu0 %v635
        %v637 = vpop.xlane.xlu0 %636
        %v638 = vadd.f32 %v594, %v595
        %639 = vadd.xlane.f32.xlu0 %v638
        %v640 = vpop.xlane.xlu0 %639
        %v641 = vadd.f32 %v596, %v597
        %642 = vadd.xlane.f32.xlu0 %v641
        %v643 = vpop.xlane.xlu0 %642
        %v644 = vadd.f32 %v598, %v599
        %645 = vadd.xlane.f32.xlu0 %v644
        %v646 = vpop.xlane.xlu0 %645
        %v647 = vadd.f32 %v600, %v601
        %648 = vadd.xlane.f32.xlu0 %v647
        %v649 = vpop.xlane.xlu0 %648
        %v650 = vld [vmem:[%s243] sm:$0xff]
        %v651 = vld [vmem:[%s243 + $0x8] sm:$0xff]
        %v652 = vld [vmem:[%s243 + $0x10] sm:$0xff]
        %v653 = vld [vmem:[%s243 + $0x18] sm:$0xff]
        %v654 = vld [vmem:[%s243 + $0x20] sm:$0xff]
        %v655 = vld [vmem:[%s243 + $0x28] sm:$0xff]
        %v656 = vld [vmem:[%s243 + $0x30] sm:$0xff]
        %v657 = vld [vmem:[%s243 + $0x38] sm:$0xff]
        %v658 = vld [vmem:[%s243 + $0x40] sm:$0xff]
        %v659 = vld [vmem:[%s243 + $0x48] sm:$0xff]
        %v660 = vld [vmem:[%s243 + $0x50] sm:$0xff]
        %v661 = vld [vmem:[%s243 + $0x58] sm:$0xff]
        %v662 = vld [vmem:[%s243 + $0x60] sm:$0xff]
        %v663 = vld [vmem:[%s243 + $0x68] sm:$0xff]
        %v664 = vld [vmem:[%s243 + $0x70] sm:$0xff]
        %v665 = vld [vmem:[%s243 + $0x78] sm:$0xff]
        %v666 = vrsqrt.pop %v604
        %v667 = vrsqrt.pop %v607
        %v668 = vrsqrt.pop %v610
        %v669 = vrsqrt.pop %v613
        %v670 = vrsqrt.pop %v616
        %v671 = vrsqrt.pop %v619
        %v672 = vrsqrt.pop %v622
        %v673 = vrsqrt.pop %v625
        %v674 = vrsqrt.pop %v628
        %v675 = vrsqrt.pop %v631
        %v676 = vrsqrt.pop %v634
        %v677 = vrsqrt.pop %v637
        %v678 = vrsqrt.pop %v640
        %v679 = vrsqrt.pop %v643
        %v680 = vrsqrt.pop %v646
        %v681 = vrsqrt.pop %v649
        %v682 = vmul.f32 %v650, %v666
        %v683 = vmul.f32 %v651, %v667
        %v684 = vmul.f32 %v652, %v668
        %v685 = vmul.f32 %v653, %v669
        %v686 = vmul.f32 %v654, %v670
        %v687 = vmul.f32 %v655, %v671
        %v688 = vmul.f32 %v656, %v672
        %v689 = vmul.f32 %v657, %v673
        %v690 = vmul.f32 %v658, %v674
        %v691 = vmul.f32 %v659, %v675
        %v692 = vmul.f32 %v660, %v676
        %v693 = vmul.f32 %v661, %v677
        %v694 = vmul.f32 %v662, %v678
        %v695 = vmul.f32 %v663, %v679
        %v696 = vmul.f32 %v664, %v680
        %v697 = vmul.f32 %v665, %v681
        %699 = vset.pattern.permute.xlu0 0
        %700 = vperm.xlu0 %699, %v682
        %v701 = vpop.permute.xlu0 %700
        %704 = vset.pattern.permute.xlu0 0
        %705 = vperm.xlu0 %704, %v683
        %v706 = vpop.permute.xlu0 %705
        %709 = vset.pattern.permute.xlu0 0
        %710 = vperm.xlu0 %709, %v684
        %v711 = vpop.permute.xlu0 %710
        %714 = vset.pattern.permute.xlu0 0
        %715 = vperm.xlu0 %714, %v685
        %v716 = vpop.permute.xlu0 %715
        %719 = vset.pattern.permute.xlu0 0
        %720 = vperm.xlu0 %719, %v686
        %v721 = vpop.permute.xlu0 %720
        %724 = vset.pattern.permute.xlu0 0
        %725 = vperm.xlu0 %724, %v687
        %v726 = vpop.permute.xlu0 %725
        %729 = vset.pattern.permute.xlu0 0
        %730 = vperm.xlu0 %729, %v688
        %v731 = vpop.permute.xlu0 %730
        %734 = vset.pattern.permute.xlu0 0
        %735 = vperm.xlu0 %734, %v689
        %v736 = vpop.permute.xlu0 %735
        %739 = vset.pattern.permute.xlu0 0
        %740 = vperm.xlu0 %739, %v690
        %v741 = vpop.permute.xlu0 %740
        %744 = vset.pattern.permute.xlu0 0
        %745 = vperm.xlu0 %744, %v691
        %v746 = vpop.permute.xlu0 %745
        %749 = vset.pattern.permute.xlu0 0
        %750 = vperm.xlu0 %749, %v692
        %v751 = vpop.permute.xlu0 %750
        %754 = vset.pattern.permute.xlu0 0
        %755 = vperm.xlu0 %754, %v693
        %v756 = vpop.permute.xlu0 %755
        %759 = vset.pattern.permute.xlu0 0
        %760 = vperm.xlu0 %759, %v694
        %v761 = vpop.permute.xlu0 %760
        %764 = vset.pattern.permute.xlu0 0
        %765 = vperm.xlu0 %764, %v695
        %v766 = vpop.permute.xlu0 %765
        %769 = vset.pattern.permute.xlu0 0
        %770 = vperm.xlu0 %769, %v696
        %v771 = vpop.permute.xlu0 %770
        %774 = vset.pattern.permute.xlu0 0
        %775 = vperm.xlu0 %774, %v697
        %v776 = vpop.permute.xlu0 %775
        %v778 = vmul.f32 %v538, %v701
        %v779 = vmul.f32 %v539, %v701
        %v780 = vmul.f32 %v540, %v706
        %v781 = vmul.f32 %v541, %v706
        %v782 = vmul.f32 %v542, %v711
        %v783 = vmul.f32 %v543, %v711
        %v784 = vmul.f32 %v544, %v716
        %v785 = vmul.f32 %v545, %v716
        %v786 = vmul.f32 %v546, %v721
        %v787 = vmul.f32 %v547, %v721
        %v788 = vmul.f32 %v548, %v726
        %v789 = vmul.f32 %v549, %v726
        %v790 = vmul.f32 %v550, %v731
        %v791 = vmul.f32 %v551, %v731
        %v792 = vmul.f32 %v552, %v736
        %v793 = vmul.f32 %v553, %v736
        %v794 = vmul.f32 %v554, %v741
        %v795 = vmul.f32 %v555, %v741
        %v796 = vmul.f32 %v556, %v746
        %v797 = vmul.f32 %v557, %v746
        %v798 = vmul.f32 %v558, %v751
        %v799 = vmul.f32 %v559, %v751
        %v800 = vmul.f32 %v560, %v756
        %v801 = vmul.f32 %v561, %v756
        %v802 = vmul.f32 %v562, %v761
        %v803 = vmul.f32 %v563, %v761
        %v804 = vmul.f32 %v564, %v766
        %v805 = vmul.f32 %v565, %v766
        %v806 = vmul.f32 %v566, %v771
        %v807 = vmul.f32 %v567, %v771
        %v808 = vmul.f32 %v568, %v776
        %v809 = vmul.f32 %v569, %v776
        %810 = vst [vmem:[%s225] sm:$0xff] %v778
        %811 = vst [vmem:[%s225 + $0x8] sm:$0xff] %v779
        %812 = vst [vmem:[%s225 + $0x10] sm:$0xff] %v780
        %813 = vst [vmem:[%s225 + $0x18] sm:$0xff] %v781
        %814 = vst [vmem:[%s225 + $0x20] sm:$0xff] %v782
        %815 = vst [vmem:[%s225 + $0x28] sm:$0xff] %v783
        %816 = vst [vmem:[%s225 + $0x30] sm:$0xff] %v784
        %817 = vst [vmem:[%s225 + $0x38] sm:$0xff] %v785
        %818 = vst [vmem:[%s225 + $0x40] sm:$0xff] %v786
        %819 = vst [vmem:[%s225 + $0x48] sm:$0xff] %v787
        %820 = vst [vmem:[%s225 + $0x50] sm:$0xff] %v788
        %821 = vst [vmem:[%s225 + $0x58] sm:$0xff] %v789
        %822 = vst [vmem:[%s225 + $0x60] sm:$0xff] %v790
        %823 = vst [vmem:[%s225 + $0x68] sm:$0xff] %v791
        %824 = vst [vmem:[%s225 + $0x70] sm:$0xff] %v792
        %825 = vst [vmem:[%s225 + $0x78] sm:$0xff] %v793
        %826 = vst [vmem:[%s225 + $0x80] sm:$0xff] %v794
        %827 = vst [vmem:[%s225 + $0x88] sm:$0xff] %v795
        %828 = vst [vmem:[%s225 + $0x90] sm:$0xff] %v796
        %829 = vst [vmem:[%s225 + $0x98] sm:$0xff] %v797
        %830 = vst [vmem:[%s225 + $0xa0] sm:$0xff] %v798
        %831 = vst [vmem:[%s225 + $0xa8] sm:$0xff] %v799
        %832 = vst [vmem:[%s225 + $0xb0] sm:$0xff] %v800
        %833 = vst [vmem:[%s225 + $0xb8] sm:$0xff] %v801
        %834 = vst [vmem:[%s225 + $0xc0] sm:$0xff] %v802
        %835 = vst [vmem:[%s225 + $0xc8] sm:$0xff] %v803
        %836 = vst [vmem:[%s225 + $0xd0] sm:$0xff] %v804
        %837 = vst [vmem:[%s225 + $0xd8] sm:$0xff] %v805
        %838 = vst [vmem:[%s225 + $0xe0] sm:$0xff] %v806
        %839 = vst [vmem:[%s225 + $0xe8] sm:$0xff] %v807
        %840 = vst [vmem:[%s225 + $0xf0] sm:$0xff] %v808
        %841 = vst [vmem:[%s225 + $0xf8] sm:$0xff] %v809
        %s842 = sand.u32 %s125, 1
        %s843 = scalar_lea.sflag [#allocation3], %s842
        %s844 = sand.u32 %s125, 1
        %s845 = smul.addr %s844, 256
        %s846 = scalar_lea.vmem [#allocation2], %s845
        // Predicated region
        $region37: #{tpu_custom_call.1} parent=35 // pred_check
          %p847 = pneg %p135
        $region38: #{tpu_custom_call.1} parent=35 // pred_check_branch
          %849 = sbr.rel (%p847) target = $region40
        $region39: #{tpu_custom_call.1} parent=35 // pred_region
          %s850 = smul.u32 16, %s18
          %s852 = ssub.s32 4096, 4096
          %853 = vsyncadd %s843, %s852
          %s854 = smul.addr %s850, 2
          %s855 = smul.addr %s854, 128
          %s856 = scalar_lea.hbm %s4, %s855
          %s857 = sshll.u32 %s846, 4
          %s858 = int_to_ptr.vmem [resolvable:$true] %s857
          %863 = dma.vmem_to_hbm [thread:$0]  %s858, 4096, %s856, %s843, 256, 256, 16
        $region40: #{tpu_custom_call.1} parent=35 // pred_fallthru
          _
      $region36: #{tpu_custom_call.1} parent=5 // pred_fallthru
        _
      %p864 = scmp.le.s32.totalorder 2, %s13
      // Predicated region
      $region41: #{tpu_custom_call.1} parent=5 // pred_check
        %p865 = pneg %p864
      $region42: #{tpu_custom_call.1} parent=5 // pred_check_branch
        %867 = sbr.rel (%p865) target = $region44
      $region43: #{tpu_custom_call.1} parent=5 // pred_region
        %s868 = ssub.s32 %s13, 2
        // Predicated region
        $region45: #{tpu_custom_call.1} parent=43 // pred_check
          %p869 = pneg %p141
        $region46: #{tpu_custom_call.1} parent=43 // pred_check_branch
          %871 = sbr.rel (%p869) target = $region48
        $region47: #{tpu_custom_call.1} parent=43 // pred_region
          %s872 = sand.u32 %s126, 1
          %s873 = scalar_lea.sflag [#allocation3], %s872
          %s874 = sand.u32 %s126, 1
          %s875 = smul.addr %s874, 256
          %s876 = scalar_lea.vmem [#allocation2], %s875
          %877 = dma.done %s873, 4096
        $region48: #{tpu_custom_call.1} parent=43 // pred_fallthru
          _
      $region44: #{tpu_custom_call.1} parent=5 // pred_fallthru
        _
    $region6: #{tpu_custom_call.1} parent=1 // loop_footer
      %s17 = sadd.s32 1, %s13
    $region7: #{tpu_custom_call.1} parent=1 // loop_footer_branch
      %12 = sbr.rel target = $region3
    $region8: #{tpu_custom_call.1} parent=1 // loop_exit
      _
    %878 = vsyncpa [#allocation3], 1
    %s879 = scalar_lea.sflag [#allocation3], 1
    %880 = vsyncpa %s879, 1

</llo_original>
